<compile_context>
chip_gen: v6e
topology: v6e:2x2x1
jax: 0.10.0
libtpu: 0.0.40
codegen_flags: <defaults>
</compile_context>

<pallas_src>
import jax
import jax.numpy as jnp
from jax.experimental import pallas as pl
from jax.experimental.pallas import tpu as pltpu


def _add_conv1x1_kernel(a_ref, b_ref, w_ref, o_ref):
    # a_ref, b_ref: (Cin, P)        float32
    # w_ref:        (Cout_blk, Cin) bfloat16
    # o_ref:        (Cout_blk, P)   float32
    x = (a_ref[...] + b_ref[...]).astype(jnp.bfloat16)  # add in f32, then quantize
    o_ref[...] = jnp.dot(w_ref[...], x, preferred_element_type=jnp.float32)


def prepare_weight(weight_oihw):
    """One-time weight prep (outside the hot path): OIHW f32 -> (Cout, Cin) bf16."""
    Cout, Cin = weight_oihw.shape[0], weight_oihw.shape[1]
    return weight_oihw.reshape(Cout, Cin).astype(jnp.bfloat16)


def _pick_n_blocks(cout):
    """Generation-aware Cout split (perf review): 1 on v6e, 2 on v5e / v7x / other."""
    kind = ""
    try:
        kind = jax.devices()[0].device_kind.lower()
    except Exception:
        pass
    if "v6" in kind:
        n = 1          # single TC, huge MXU: extra grid step not repaid
    else:
        n = 2          # v5e: pipeline DMA under MXU; v7x: 2 TCs via "parallel"
    # bf16 weight block: min sublane tile is 16 -> require tcout % 16 == 0.
    while n > 1 and (cout % n != 0 or (cout // n) % 16 != 0):
        n //= 2
    return max(n, 1)


def add_conv1x1(x239_nchw, x224_nchw, w_coci_bf16):
    """Fused (x239 + x224) -> 1x1 conv (no bias), matching PyTorch Conv2d.

    x239_nchw, x224_nchw: (N, Cin, H, W) float32 (N must be 1 for the
                          transpose-free channels-as-rows layout used here)
    w_coci_bf16:          (Cout, Cin) bfloat16 (pre-converted via prepare_weight)
    returns:              (N, Cout, H, W) float32
    """
    N, Cin, H, W = x239_nchw.shape
    Cout = w_coci_bf16.shape[0]
    assert N == 1, "transpose-free channels-as-rows layout assumes N == 1"
    P = N * H * W

    # Free reshapes (contiguous views), no transposes, no casts in the hot path.
    a = x239_nchw.reshape(Cin, P)       # (Cin, P) f32
    b = x224_nchw.reshape(Cin, P)       # (Cin, P) f32

    n_blocks = _pick_n_blocks(Cout)
    tcout = Cout // n_blocks

    out = pl.pallas_call(
        _add_conv1x1_kernel,
        out_shape=jax.ShapeDtypeStruct((Cout, P), jnp.float32),
        grid_spec=pltpu.PrefetchScalarGridSpec(
            num_scalar_prefetch=0,
            grid=(n_blocks,),
            in_specs=[
                pl.BlockSpec((Cin, P), lambda i: (0, 0)),
                pl.BlockSpec((Cin, P), lambda i: (0, 0)),
                pl.BlockSpec((tcout, Cin), lambda i: (i, 0)),
            ],
            out_specs=pl.BlockSpec((tcout, P), lambda i: (i, 0)),
        ),
        compiler_params=pltpu.CompilerParams(
            dimension_semantics=("parallel",),
        ),
        cost_estimate=pl.CostEstimate(
            flops=2 * P * Cin * Cout,
            transcendentals=0,
            bytes_accessed=2 * (Cin * P * 4) + Cout * Cin * 2 + Cout * P * 4,
        ),
    )(a, b, w_coci_bf16)

    # (Cout, P) -> (1, Cout, H, W): free reshape, no transpose.
    return out.reshape(N, Cout, H, W)


if __name__ == "__main__":
    key = jax.random.PRNGKey(0)
    k1, k2, k3 = jax.random.split(key, 3)

    # Shapes implied by the module's forward pass (already small).
    N, Cin, H, W = 1, 176, 14, 14
    Cout = 1056

    x239 = jax.random.normal(k1, (N, Cin, H, W), dtype=jnp.float32)
    x224 = jax.random.normal(k2, (N, Cin, H, W), dtype=jnp.float32)
    # Deterministic synthetic conv weight (PyTorch OIHW layout: Cout, Cin, 1, 1).
    weight = jax.random.normal(k3, (Cout, Cin, 1, 1), dtype=jnp.float32) * 0.05

    # One-time weight prep (outside the hot path), then the fused kernel call.
    w_prepared = jax.block_until_ready(prepare_weight(weight))
    out = add_conv1x1(x239, x224, w_prepared)
    jax.block_until_ready(out)
    assert out.shape == (N, Cout, H, W)

    P = N * H * W
    x_sum = (x239 + x224).reshape(Cin, P)

    # Reference 1: mirrors the kernel's bf16-input / f32-accumulate math exactly.
    w_q = weight.reshape(Cout, Cin).astype(jnp.bfloat16).astype(jnp.float32)
    x_q = x_sum.astype(jnp.bfloat16).astype(jnp.float32)
    ref_bf16 = jnp.dot(w_q, x_q).reshape(N, Cout, H, W)
    assert jnp.allclose(out, ref_bf16, atol=1e-3, rtol=1e-3)

    # Reference 2: full-f32 PyTorch semantics (loose tolerance: bf16 weights/acts).
    ref_f32 = jnp.dot(weight.reshape(Cout, Cin), x_sum).reshape(N, Cout, H, W)
    assert jnp.allclose(out, ref_f32, atol=1e-1, rtol=1e-1)

    print("KERNEL_OK")
</pallas_src>

<mosaic_0001>
module attributes {stable_mosaic.version = 11 : i64} {
  func.func @_add_conv1x1_kernel(%arg0: i32, %arg1: memref<176x196xf32, #tpu.memory_space<vmem>>, %arg2: memref<176x196xf32, #tpu.memory_space<vmem>>, %arg3: memref<528x176xbf16, #tpu.memory_space<vmem>>, %arg4: memref<528x196xf32, #tpu.memory_space<vmem>>) attributes {dimension_semantics = [#tpu.dimension_semantics<parallel>], iteration_bounds = array<i64: 2>, scalar_prefetch = 0 : i64, scratch_operands = 0 : i64, tpu.core_type = #tpu.core_type<tc>, window_params = [{pipeline_mode = #tpu.pipeline_mode<synchronous>, transform_indices = @transform_0, window_bounds = array<i64: 176, 196>}, {pipeline_mode = #tpu.pipeline_mode<synchronous>, transform_indices = @transform_1, window_bounds = array<i64: 176, 196>}, {transform_indices = @transform_2, window_bounds = array<i64: 528, 176>}, {transform_indices = @transform_3, window_bounds = array<i64: 528, 196>}]} {
    %c0 = arith.constant 0 : index
    %c0_0 = arith.constant 0 : index
    %0 = vector.load %arg1[%c0, %c0_0] : memref<176x196xf32, #tpu.memory_space<vmem>>, vector<176x196xf32>
    %c0_1 = arith.constant 0 : index
    %c0_2 = arith.constant 0 : index
    %1 = vector.load %arg2[%c0_1, %c0_2] : memref<176x196xf32, #tpu.memory_space<vmem>>, vector<176x196xf32>
    %2 = arith.addf %0, %1 : vector<176x196xf32>
    %3 = arith.truncf %2 : vector<176x196xf32> to vector<176x196xbf16>
    %c0_3 = arith.constant 0 : index
    %c0_4 = arith.constant 0 : index
    %4 = vector.load %arg3[%c0_3, %c0_4] : memref<528x176xbf16, #tpu.memory_space<vmem>>, vector<528x176xbf16>
    %cst = arith.constant dense<0.000000e+00> : vector<528x196xf32>
    %5 = tpu.matmul %4, %3, %cst {dimension_numbers = #tpu.dot_dimension_numbers<[1], [0], [0], [1], [0, 0, 1, 1], [], []>} : vector<528x176xbf16>, vector<176x196xbf16>, vector<528x196xf32> -> vector<528x196xf32>
    %c0_5 = arith.constant 0 : index
    %c0_6 = arith.constant 0 : index
    %6 = vector.load %arg4[%c0_5, %c0_6] : memref<528x196xf32, #tpu.memory_space<vmem>>, vector<528x196xf32>
    tpu.vector_store %arg4[%c0_5, %c0_6], %5 {strides = array<i32>} : memref<528x196xf32, #tpu.memory_space<vmem>>, vector<528x196xf32>,
    return
  }
  func.func @transform_0(%arg0: i32) -> (i32, i32) {
    %c0_i32 = arith.constant 0 : i32
    %c0_i32_0 = arith.constant 0 : i32
    %c0_i32_1 = arith.constant 0 : i32
    return %c0_i32, %c0_i32_0 : i32, i32
  }
  func.func @transform_1(%arg0: i32) -> (i32, i32) {
    %c0_i32 = arith.constant 0 : i32
    %c0_i32_0 = arith.constant 0 : i32
    %c0_i32_1 = arith.constant 0 : i32
    return %c0_i32, %c0_i32_0 : i32, i32
  }
  func.func @transform_2(%arg0: i32) -> (i32, i32) {
    %c0_i32 = arith.constant 0 : i32
    %c0_i32_0 = arith.constant 0 : i32
    return %arg0, %c0_i32 : i32, i32
  }
  func.func @transform_3(%arg0: i32) -> (i32, i32) {
    %c0_i32 = arith.constant 0 : i32
    %c0_i32_0 = arith.constant 0 : i32
    return %arg0, %c0_i32 : i32, i32
  }
}

</mosaic_0001>

<llo_original>
// kernel: tpu_custom_call.1
$region0: #{tpu_custom_call.1}
  #allocation0 [shape = 'u32[]', space=smem, size = 0x4, offset = 0x4, fixed_abs, tag = 'smem constant byte address 0x4 - core index']
  #allocation1 [shape = 'u32[144,128]{1,0:T(1,128)}', space=vmem, size = 0x12000, scoped, tag = 'internal scratch']
  %s0 = inlined_call_operand.vmem [shape: f32[176,196], index: 0, kind: input, shape index: {}]
  %s1 = inlined_call_operand.vmem [shape: f32[176,196], index: 1, kind: input, shape index: {}]
  %s2 = inlined_call_operand.vmem [shape: bf16[1056,176], index: 2, kind: input, shape index: {}]
  %s3 = inlined_call_operand.vmem [shape: f32[1056,196], index: 3, kind: output, shape index: {}]
  %s4 = sld [smem:[#allocation0]]
  $region45: #{tpu_custom_call.1} parent=0
    _
  %s6 = ssub.s32 1, %s4
  %s7 = scalar_select 0, %s6, %s4
  loop: start=0, step=1, limit=4
  $region2: #{tpu_custom_call.1} parent=0 // loop_pre_header
    _
  $region3: #{tpu_custom_call.1} parent=0 // loop_header
    %s9 = sphi 0, %s13
    %p10 = scmp.ge.s32.totalorder %s9, 4
    %s17 = sphi 0, %s17
    %s19 = sphi 0, %s17
    %s20 = sphi 0, %s19
    %s34 = sphi 0, %s20
    %s38 = sphi 0, %s38
    %s40 = sphi 0, %s38
    %s41 = sphi 0, %s40
    %s55 = sphi 0, %s41
    %s61 = sphi 0, %s63
    %s64 = sphi 0, %s61
    %s65 = sphi 0, %s64
    %s81 = sphi 0, %s65
    %s87 = sphi 0, %s89
    %s90 = sphi 0, %s87
    %s91 = sphi 0, %s90
    %s107 = sphi 0, %s91
  $region4: #{tpu_custom_call.1} parent=0 // loop_header_branch
    %12 = sbr.rel (%p10) target = $region8
  $region5: #{tpu_custom_call.1} parent=0 // loop_body
    %s14 = ssub.s32 %s9, 1
    %s15 = ssub.s32 %s9, 2
    %s16 = sadd.s32 %s9, 1
    %s18 = sadd.s32 %s17, 1
    %p21 = scmp.eq.s32.totalorder %s9, 1
    %p22 = scmp.ne.s32.totalorder %s17, %s19
    %p23 = scmp.eq.s32.totalorder %s9, 0
    %p24 = por %p22, %p23
    %p25 = scmp.ne.s32.totalorder %s17, %s19
    %p26 = scmp.eq.s32.totalorder %s14, 1
    %p27 = por %p25, %p26
    %p28 = scmp.ne.s32.totalorder %s19, %s20
    %p29 = scmp.eq.s32.totalorder %s14, 0
    %p30 = por %p28, %p29
    %p31 = scmp.ne.s32.totalorder %s19, %s20
    %p32 = scmp.eq.s32.totalorder %s15, 1
    %p33 = por %p31, %p32
    %p35 = scmp.ne.s32.totalorder %s20, %s34
    %p36 = scmp.eq.s32.totalorder %s15, 0
    %p37 = por %p35, %p36
    %s39 = sadd.s32 %s38, 1
    %p42 = scmp.eq.s32.totalorder %s9, 1
    %p43 = scmp.ne.s32.totalorder %s38, %s40
    %p44 = scmp.eq.s32.totalorder %s9, 0
    %p45 = por %p43, %p44
    %p46 = scmp.ne.s32.totalorder %s38, %s40
    %p47 = scmp.eq.s32.totalorder %s14, 1
    %p48 = por %p46, %p47
    %p49 = scmp.ne.s32.totalorder %s40, %s41
    %p50 = scmp.eq.s32.totalorder %s14, 0
    %p51 = por %p49, %p50
    %p52 = scmp.ne.s32.totalorder %s40, %s41
    %p53 = scmp.eq.s32.totalorder %s15, 1
    %p54 = por %p52, %p53
    %p56 = scmp.ne.s32.totalorder %s41, %s55
    %p57 = scmp.eq.s32.totalorder %s15, 0
    %p58 = por %p56, %p57
    %s59 = ssub.s32 %s9, %s16
    %p60 = scmp.eq.s32.totalorder %s59, 0
    %s62 = sadd.s32 %s61, 1
    %s63 = scalar_select %p60, %s61, %s62
    %p66 = pneg %p60
    %p67 = scmp.eq.s32.totalorder %s9, 1
    %p68 = por %p66, %p67
    %p69 = scmp.ne.s32.totalorder %s61, %s64
    %p70 = scmp.eq.s32.totalorder %s9, 0
    %p71 = por %p69, %p70
    %p72 = scmp.ne.s32.totalorder %s61, %s64
    %p73 = scmp.eq.s32.totalorder %s14, 1
    %p74 = por %p72, %p73
    %p75 = scmp.ne.s32.totalorder %s64, %s65
    %p76 = scmp.eq.s32.totalorder %s14, 0
    %p77 = por %p75, %p76
    %p78 = scmp.ne.s32.totalorder %s64, %s65
    %p79 = scmp.eq.s32.totalorder %s15, 1
    %p80 = por %p78, %p79
    %p82 = scmp.ne.s32.totalorder %s65, %s81
    %p83 = scmp.eq.s32.totalorder %s15, 0
    %p84 = por %p82, %p83
    %s85 = ssub.s32 %s9, %s16
    %p86 = scmp.eq.s32.totalorder %s85, 0
    %s88 = sadd.s32 %s87, 1
    %s89 = scalar_select %p86, %s87, %s88
    %p92 = pneg %p86
    %p93 = scmp.eq.s32.totalorder %s9, 1
    %p94 = por %p92, %p93
    %p95 = scmp.ne.s32.totalorder %s87, %s90
    %p96 = scmp.eq.s32.totalorder %s9, 0
    %p97 = por %p95, %p96
    %p98 = scmp.ne.s32.totalorder %s87, %s90
    %p99 = scmp.eq.s32.totalorder %s14, 1
    %p100 = por %p98, %p99
    %p101 = scmp.ne.s32.totalorder %s90, %s91
    %p102 = scmp.eq.s32.totalorder %s14, 0
    %p103 = por %p101, %p102
    %p104 = scmp.ne.s32.totalorder %s90, %s91
    %p105 = scmp.eq.s32.totalorder %s15, 1
    %p106 = por %p104, %p105
    %p108 = scmp.ne.s32.totalorder %s91, %s107
    %p109 = scmp.eq.s32.totalorder %s15, 0
    %p110 = por %p108, %p109
    %p111 = scmp.le.s32.totalorder 1, %s9
    %p112 = scmp.lt.s32.totalorder %s9, 3
    %p113 = pnand %p111, %p112
    %p114 = pneg %p113
    // Predicated region
    $region9: #{tpu_custom_call.1} parent=5 // pred_check
      _
    $region10: #{tpu_custom_call.1} parent=5 // pred_check_branch
      %116 = sbr.rel (%p113) target = $region12
    $region11: #{tpu_custom_call.1} parent=5 // pred_region
      %s117 = ssub.s32 %s9, 1
      // Predicated region
      $region13: #{tpu_custom_call.1} parent=11 // pred_check
        %p118 = pneg %p30
      $region14: #{tpu_custom_call.1} parent=11 // pred_check_branch
        %120 = sbr.rel (%p118) target = $region16
      $region15: #{tpu_custom_call.1} parent=11 // pred_region
        _
      $region16: #{tpu_custom_call.1} parent=11 // pred_fallthru
        _
      // Predicated region
      $region17: #{tpu_custom_call.1} parent=11 // pred_check
        %p121 = pneg %p51
      $region18: #{tpu_custom_call.1} parent=11 // pred_check_branch
        %123 = sbr.rel (%p121) target = $region20
      $region19: #{tpu_custom_call.1} parent=11 // pred_region
        _
      $region20: #{tpu_custom_call.1} parent=11 // pred_fallthru
        _
    $region12: #{tpu_custom_call.1} parent=5 // pred_fallthru
      _
    %p124 = scmp.lt.s32.totalorder %s9, 2
    // Predicated region
    $region21: #{tpu_custom_call.1} parent=5 // pred_check
      %p125 = pneg %p124
    $region22: #{tpu_custom_call.1} parent=5 // pred_check_branch
      %127 = sbr.rel (%p125) target = $region24
    $region23: #{tpu_custom_call.1} parent=5 // pred_region
      // Predicated region
      $region25: #{tpu_custom_call.1} parent=23 // pred_check
        %p128 = pneg %p71
      $region26: #{tpu_custom_call.1} parent=23 // pred_check_branch
        %130 = sbr.rel (%p128) target = $region28
      $region27: #{tpu_custom_call.1} parent=23 // pred_region
        %s131 = smul.u32 66, %s9
        %p132 = scmp.lt.s32.totalorder %s131, 131
        %s133 = scalar_select %p132, %s131, 131
        %s134 = smul.addr %s133, 2
        %s135 = smul.addr %s134, 4
        %s136 = scalar_lea.vmem %s2, %s135
        %s137 = smul.u32 66, %s9
      $region28: #{tpu_custom_call.1} parent=23 // pred_fallthru
        _
    $region24: #{tpu_custom_call.1} parent=5 // pred_fallthru
      _
    %p138 = scmp.le.s32.totalorder 1, %s9
    %p139 = scmp.lt.s32.totalorder %s9, 3
    %p140 = pnand %p138, %p139
    %p141 = pneg %p140
    // Predicated region
    $region29: #{tpu_custom_call.1} parent=5 // pred_check
      _
    $region30: #{tpu_custom_call.1} parent=5 // pred_check_branch
      %143 = sbr.rel (%p140) target = $region32
    $region31: #{tpu_custom_call.1} parent=5 // pred_region
      %s144 = ssub.s32 %s9, 1
      %p145 = pneg %p30
      %p146 = pneg %p27
      %p147 = pneg %p51
      %p148 = pneg %p48
      %s149 = smul.u32 66, %s14
      %p150 = scmp.lt.s32.totalorder %s149, 131
      %s151 = scalar_select %p150, %s149, 131
      %s152 = smul.addr %s151, 2
      %s153 = smul.addr %s152, 4
      %s154 = scalar_lea.vmem %s2, %s153
      %p155 = pneg %p77
      %p156 = pneg %p74
      %p157 = pneg %p103
      %p158 = pneg %p100
      %s159 = smul.u32 66, %s14
      %p160 = scmp.lt.s32.totalorder %s159, 131
      %s161 = scalar_select %p160, %s159, 131
      %s162 = smul.addr %s161, 2
      %s163 = smul.addr %s162, 8
      %s164 = scalar_lea.vmem %s3, %s163
      %s165 = smul.u32 66, %s14
      %p166 = scmp.lt.s32.totalorder %s165, 131
      %s167 = scalar_select %p166, %s165, 131
      %s168 = smul.addr %s167, 2
      %s169 = smul.addr %s168, 4
      %s170 = scalar_lea.vmem %s2, %s169
      %s171 = smul.u32 66, %s14
      %s172 = smul.u32 66, %s14
      %p173 = scmp.lt.s32.totalorder %s172, 131
      %s174 = scalar_select %p173, %s172, 131
      %s175 = smul.addr %s174, 2
      %s176 = smul.addr %s175, 8
      %s177 = scalar_lea.vmem %s3, %s176
      %s178 = smul.u32 66, %s14
      %v180 = vld [vmem:[%s0] sm:$0xff]
      %v181 = vld [vmem:[%s0 + $0x8] sm:$0xff]
      %v182 = vld [vmem:[%s0 + $0x10] sm:$0xff]
      %v183 = vld [vmem:[%s0 + $0x18] sm:$0xff]
      %v184 = vld [vmem:[%s0 + $0x20] sm:$0xff]
      %v185 = vld [vmem:[%s0 + $0x28] sm:$0xff]
      %v186 = vld [vmem:[%s0 + $0x30] sm:$0xff]
      %v187 = vld [vmem:[%s0 + $0x38] sm:$0xff]
      %v188 = vld [vmem:[%s0 + $0x40] sm:$0xff]
      %v189 = vld [vmem:[%s0 + $0x48] sm:$0xff]
      %v190 = vld [vmem:[%s0 + $0x50] sm:$0xff]
      %v191 = vld [vmem:[%s0 + $0x58] sm:$0xff]
      %v192 = vld [vmem:[%s0 + $0x60] sm:$0xff]
      %v193 = vld [vmem:[%s0 + $0x68] sm:$0xff]
      %v194 = vld [vmem:[%s0 + $0x70] sm:$0xff]
      %v195 = vld [vmem:[%s0 + $0x78] sm:$0xff]
      %v196 = vld [vmem:[%s0 + $0x80] sm:$0xff]
      %v197 = vld [vmem:[%s0 + $0x88] sm:$0xff]
      %v198 = vld [vmem:[%s0 + $0x90] sm:$0xff]
      %v199 = vld [vmem:[%s0 + $0x98] sm:$0xff]
      %v200 = vld [vmem:[%s0 + $0xa0] sm:$0xff]
      %v201 = vld [vmem:[%s0 + $0xa8] sm:$0xff]
      %v202 = vld [vmem:[%s0 + $0xb0] sm:$0xff]
      %v203 = vld [vmem:[%s0 + $0xb8] sm:$0xff]
      %v204 = vld [vmem:[%s0 + $0xc0] sm:$0xff]
      %v205 = vld [vmem:[%s0 + $0xc8] sm:$0xff]
      %v206 = vld [vmem:[%s0 + $0xd0] sm:$0xff]
      %v207 = vld [vmem:[%s0 + $0xd8] sm:$0xff]
      %v208 = vld [vmem:[%s0 + $0xe0] sm:$0xff]
      %v209 = vld [vmem:[%s0 + $0xe8] sm:$0xff]
      %v210 = vld [vmem:[%s0 + $0xf0] sm:$0xff]
      %v211 = vld [vmem:[%s0 + $0xf8] sm:$0xff]
      %v212 = vld [vmem:[%s0 + $0x100] sm:$0xff]
      %v213 = vld [vmem:[%s0 + $0x108] sm:$0xff]
      %v214 = vld [vmem:[%s0 + $0x110] sm:$0xff]
      %v215 = vld [vmem:[%s0 + $0x118] sm:$0xff]
      %v216 = vld [vmem:[%s0 + $0x120] sm:$0xff]
      %v217 = vld [vmem:[%s0 + $0x128] sm:$0xff]
      %v218 = vld [vmem:[%s0 + $0x130] sm:$0xff]
      %v219 = vld [vmem:[%s0 + $0x138] sm:$0xff]
      %v220 = vld [vmem:[%s0 + $0x140] sm:$0xff]
      %v221 = vld [vmem:[%s0 + $0x148] sm:$0xff]
      %v222 = vld [vmem:[%s0 + $0x150] sm:$0xff]
      %v223 = vld [vmem:[%s0 + $0x158] sm:$0xff]
      %v224 = vld [vmem:[%s1] sm:$0xff]
      %v225 = vld [vmem:[%s1 + $0x8] sm:$0xff]
      %v226 = vld [vmem:[%s1 + $0x10] sm:$0xff]
      %v227 = vld [vmem:[%s1 + $0x18] sm:$0xff]
      %v228 = vld [vmem:[%s1 + $0x20] sm:$0xff]
      %v229 = vld [vmem:[%s1 + $0x28] sm:$0xff]
      %v230 = vld [vmem:[%s1 + $0x30] sm:$0xff]
      %v231 = vld [vmem:[%s1 + $0x38] sm:$0xff]
      %v232 = vld [vmem:[%s1 + $0x40] sm:$0xff]
      %v233 = vld [vmem:[%s1 + $0x48] sm:$0xff]
      %v234 = vld [vmem:[%s1 + $0x50] sm:$0xff]
      %v235 = vld [vmem:[%s1 + $0x58] sm:$0xff]
      %v236 = vld [vmem:[%s1 + $0x60] sm:$0xff]
      %v237 = vld [vmem:[%s1 + $0x68] sm:$0xff]
      %v238 = vld [vmem:[%s1 + $0x70] sm:$0xff]
      %v239 = vld [vmem:[%s1 + $0x78] sm:$0xff]
      %v240 = vld [vmem:[%s1 + $0x80] sm:$0xff]
      %v241 = vld [vmem:[%s1 + $0x88] sm:$0xff]
      %v242 = vld [vmem:[%s1 + $0x90] sm:$0xff]
      %v243 = vld [vmem:[%s1 + $0x98] sm:$0xff]
      %v244 = vld [vmem:[%s1 + $0xa0] sm:$0xff]
      %v245 = vld [vmem:[%s1 + $0xa8] sm:$0xff]
      %v246 = vld [vmem:[%s1 + $0xb0] sm:$0xff]
      %v247 = vld [vmem:[%s1 + $0xb8] sm:$0xff]
      %v248 = vld [vmem:[%s1 + $0xc0] sm:$0xff]
      %v249 = vld [vmem:[%s1 + $0xc8] sm:$0xff]
      %v250 = vld [vmem:[%s1 + $0xd0] sm:$0xff]
      %v251 = vld [vmem:[%s1 + $0xd8] sm:$0xff]
      %v252 = vld [vmem:[%s1 + $0xe0] sm:$0xff]
      %v253 = vld [vmem:[%s1 + $0xe8] sm:$0xff]
      %v254 = vld [vmem:[%s1 + $0xf0] sm:$0xff]
      %v255 = vld [vmem:[%s1 + $0xf8] sm:$0xff]
      %v256 = vld [vmem:[%s1 + $0x100] sm:$0xff]
      %v257 = vld [vmem:[%s1 + $0x108] sm:$0xff]
      %v258 = vld [vmem:[%s1 + $0x110] sm:$0xff]
      %v259 = vld [vmem:[%s1 + $0x118] sm:$0xff]
      %v260 = vld [vmem:[%s1 + $0x120] sm:$0xff]
      %v261 = vld [vmem:[%s1 + $0x128] sm:$0xff]
      %v262 = vld [vmem:[%s1 + $0x130] sm:$0xff]
      %v263 = vld [vmem:[%s1 + $0x138] sm:$0xff]
      %v264 = vld [vmem:[%s1 + $0x140] sm:$0xff]
      %v265 = vld [vmem:[%s1 + $0x148] sm:$0xff]
      %v266 = vld [vmem:[%s1 + $0x150] sm:$0xff]
      %v267 = vld [vmem:[%s1 + $0x158] sm:$0xff]
      %v268 = vadd.f32 %v180, %v224
      %v269 = vadd.f32 %v181, %v225
      %v270 = vadd.f32 %v182, %v226
      %v271 = vadd.f32 %v183, %v227
      %v272 = vadd.f32 %v184, %v228
      %v273 = vadd.f32 %v185, %v229
      %v274 = vadd.f32 %v186, %v230
      %v275 = vadd.f32 %v187, %v231
      %v276 = vadd.f32 %v188, %v232
      %v277 = vadd.f32 %v189, %v233
      %v278 = vadd.f32 %v190, %v234
      %v279 = vadd.f32 %v191, %v235
      %v280 = vadd.f32 %v192, %v236
      %v281 = vadd.f32 %v193, %v237
      %v282 = vadd.f32 %v194, %v238
      %v283 = vadd.f32 %v195, %v239
      %v284 = vadd.f32 %v196, %v240
      %v285 = vadd.f32 %v197, %v241
      %v286 = vadd.f32 %v198, %v242
      %v287 = vadd.f32 %v199, %v243
      %v288 = vadd.f32 %v200, %v244
      %v289 = vadd.f32 %v201, %v245
      %v290 = vadd.f32 %v202, %v246
      %v291 = vadd.f32 %v203, %v247
      %v292 = vadd.f32 %v204, %v248
      %v293 = vadd.f32 %v205, %v249
      %v294 = vadd.f32 %v206, %v250
      %v295 = vadd.f32 %v207, %v251
      %v296 = vadd.f32 %v208, %v252
      %v297 = vadd.f32 %v209, %v253
      %v298 = vadd.f32 %v210, %v254
      %v299 = vadd.f32 %v211, %v255
      %v300 = vadd.f32 %v212, %v256
      %v301 = vadd.f32 %v213, %v257
      %v302 = vadd.f32 %v214, %v258
      %v303 = vadd.f32 %v215, %v259
      %v304 = vadd.f32 %v216, %v260
      %v305 = vadd.f32 %v217, %v261
      %v306 = vadd.f32 %v218, %v262
      %v307 = vadd.f32 %v219, %v263
      %v308 = vadd.f32 %v220, %v264
      %v309 = vadd.f32 %v221, %v265
      %v310 = vadd.f32 %v222, %v266
      %v311 = vadd.f32 %v223, %v267
      %v312 = vpack.c.bf16 %v270, %v268
      %v313 = vpack.c.bf16 %v271, %v269
      %v314 = vpack.c.bf16 %v274, %v272
      %v315 = vpack.c.bf16 %v275, %v273
      %v316 = vpack.c.bf16 %v278, %v276
      %v317 = vpack.c.bf16 %v279, %v277
      %v318 = vpack.c.bf16 %v282, %v280
      %v319 = vpack.c.bf16 %v283, %v281
      %v320 = vpack.c.bf16 %v286, %v284
      %v321 = vpack.c.bf16 %v287, %v285
      %v322 = vpack.c.bf16 %v290, %v288
      %v323 = vpack.c.bf16 %v291, %v289
      %v324 = vpack.c.bf16 %v294, %v292
      %v325 = vpack.c.bf16 %v295, %v293
      %v326 = vpack.c.bf16 %v298, %v296
      %v327 = vpack.c.bf16 %v299, %v297
      %v328 = vpack.c.bf16 %v302, %v300
      %v329 = vpack.c.bf16 %v303, %v301
      %v330 = vpack.c.bf16 %v306, %v304
      %v331 = vpack.c.bf16 %v307, %v305
      %v332 = vpack.c.bf16 %v310, %v308
      %v333 = vpack.c.bf16 %v311, %v309
      %v334 = vld [vmem:[%s170] sm:$0xff]
      %v335 = vld [vmem:[%s170 + $0x8] sm:$0xff]
      %v336 = vld [vmem:[%s170 + $0x10] sm:$0xff]
      %v337 = vld [vmem:[%s170 + $0x18] sm:$0xff]
      %v338 = vld [vmem:[%s170 + $0x20] sm:$0xff]
      %v339 = vld [vmem:[%s170 + $0x28] sm:$0xff]
      %v340 = vld [vmem:[%s170 + $0x30] sm:$0xff]
      %v341 = vld [vmem:[%s170 + $0x38] sm:$0xff]
      %v342 = vld [vmem:[%s170 + $0x40] sm:$0xff]
      %v343 = vld [vmem:[%s170 + $0x48] sm:$0xff]
      %v344 = vld [vmem:[%s170 + $0x50] sm:$0xff]
      %v345 = vld [vmem:[%s170 + $0x58] sm:$0xff]
      %v346 = vld [vmem:[%s170 + $0x60] sm:$0xff]
      %v347 = vld [vmem:[%s170 + $0x68] sm:$0xff]
      %v348 = vld [vmem:[%s170 + $0x70] sm:$0xff]
      %v349 = vld [vmem:[%s170 + $0x78] sm:$0xff]
      %v350 = vld [vmem:[%s170 + $0x80] sm:$0xff]
      %v351 = vld [vmem:[%s170 + $0x88] sm:$0xff]
      %v352 = vld [vmem:[%s170 + $0x90] sm:$0xff]
      %v353 = vld [vmem:[%s170 + $0x98] sm:$0xff]
      %v354 = vld [vmem:[%s170 + $0xa0] sm:$0xff]
      %v355 = vld [vmem:[%s170 + $0xa8] sm:$0xff]
      %v356 = vld [vmem:[%s170 + $0xb0] sm:$0xff]
      %v357 = vld [vmem:[%s170 + $0xb8] sm:$0xff]
      %v358 = vld [vmem:[%s170 + $0xc0] sm:$0xff]
      %v359 = vld [vmem:[%s170 + $0xc8] sm:$0xff]
      %v360 = vld [vmem:[%s170 + $0xd0] sm:$0xff]
      %v361 = vld [vmem:[%s170 + $0xd8] sm:$0xff]
      %v362 = vld [vmem:[%s170 + $0xe0] sm:$0xff]
      %v363 = vld [vmem:[%s170 + $0xe8] sm:$0xff]
      %v364 = vld [vmem:[%s170 + $0xf0] sm:$0xff]
      %v365 = vld [vmem:[%s170 + $0xf8] sm:$0xff]
      %v366 = vld [vmem:[%s170 + $0x100] sm:$0xff]
      %v367 = vld [vmem:[%s170 + $0x108] sm:$0xff]
      %v368 = vld [vmem:[%s170 + $0x110] sm:$0xff]
      %v369 = vld [vmem:[%s170 + $0x118] sm:$0xff]
      %v370 = vld [vmem:[%s170 + $0x120] sm:$0xff]
      %v371 = vld [vmem:[%s170 + $0x128] sm:$0xff]
      %v372 = vld [vmem:[%s170 + $0x130] sm:$0xff]
      %v373 = vld [vmem:[%s170 + $0x138] sm:$0xff]
      %v374 = vld [vmem:[%s170 + $0x140] sm:$0xff]
      %v375 = vld [vmem:[%s170 + $0x148] sm:$0xff]
      %v376 = vld [vmem:[%s170 + $0x150] sm:$0xff]
      %v377 = vld [vmem:[%s170 + $0x158] sm:$0xff]
      %v378 = vld [vmem:[%s170 + $0x160] sm:$0xff]
      %v379 = vld [vmem:[%s170 + $0x168] sm:$0xff]
      %v380 = vld [vmem:[%s170 + $0x170] sm:$0xff]
      %v381 = vld [vmem:[%s170 + $0x178] sm:$0xff]
      %v382 = vld [vmem:[%s170 + $0x180] sm:$0xff]
      %v383 = vld [vmem:[%s170 + $0x188] sm:$0xff]
      %v384 = vld [vmem:[%s170 + $0x190] sm:$0xff]
      %v385 = vld [vmem:[%s170 + $0x198] sm:$0xff]
      %v386 = vld [vmem:[%s170 + $0x1a0] sm:$0xff]
      %v387 = vld [vmem:[%s170 + $0x1a8] sm:$0xff]
      %v388 = vld [vmem:[%s170 + $0x1b0] sm:$0xff]
      %v389 = vld [vmem:[%s170 + $0x1b8] sm:$0xff]
      %v390 = vld [vmem:[%s170 + $0x1c0] sm:$0xff]
      %v391 = vld [vmem:[%s170 + $0x1c8] sm:$0xff]
      %v392 = vld [vmem:[%s170 + $0x1d0] sm:$0xff]
      %v393 = vld [vmem:[%s170 + $0x1d8] sm:$0xff]
      %v394 = vld [vmem:[%s170 + $0x1e0] sm:$0xff]
      %v395 = vld [vmem:[%s170 + $0x1e8] sm:$0xff]
      %v396 = vld [vmem:[%s170 + $0x1f0] sm:$0xff]
      %v397 = vld [vmem:[%s170 + $0x1f8] sm:$0xff]
      %v398 = vld [vmem:[%s170 + $0x200] sm:$0xff]
      %v399 = vld [vmem:[%s170 + $0x208] sm:$0xff]
      %v466 = vunpack.c.l.b16 %v334
      %v467 = vunpack.c.h.b16 %v334
      %v468 = vunpack.c.l.b16 %v335
      %v469 = vunpack.c.h.b16 %v335
      %v470 = vunpack.c.l.b16 %v336
      %v471 = vunpack.c.h.b16 %v336
      %v472 = vunpack.c.l.b16 %v337
      %v473 = vunpack.c.h.b16 %v337
      %v474 = vunpack.c.l.b16 %v338
      %v475 = vunpack.c.h.b16 %v338
      %v476 = vunpack.c.l.b16 %v339
      %v477 = vunpack.c.h.b16 %v339
      %v478 = vunpack.c.l.b16 %v340
      %v479 = vunpack.c.h.b16 %v340
      %v480 = vunpack.c.l.b16 %v341
      %v481 = vunpack.c.h.b16 %v341
      %v482 = vunpack.c.l.b16 %v342
      %v483 = vunpack.c.h.b16 %v342
      %v484 = vunpack.c.l.b16 %v343
      %v485 = vunpack.c.h.b16 %v343
      %v486 = vunpack.c.l.b16 %v344
      %v487 = vunpack.c.h.b16 %v344
      %v488 = vunpack.c.l.b16 %v345
      %v489 = vunpack.c.h.b16 %v345
      %v490 = vunpack.c.l.b16 %v346
      %v491 = vunpack.c.h.b16 %v346
      %v492 = vunpack.c.l.b16 %v347
      %v493 = vunpack.c.h.b16 %v347
      %v494 = vunpack.c.l.b16 %v348
      %v495 = vunpack.c.h.b16 %v348
      %v496 = vunpack.c.l.b16 %v349
      %v497 = vunpack.c.h.b16 %v349
      %v498 = vunpack.c.l.b16 %v350
      %v499 = vunpack.c.h.b16 %v350
      %v500 = vunpack.c.l.b16 %v351
      %v501 = vunpack.c.h.b16 %v351
      %v502 = vunpack.c.l.b16 %v352
      %v503 = vunpack.c.h.b16 %v352
      %v504 = vunpack.c.l.b16 %v353
      %v505 = vunpack.c.h.b16 %v353
      %v506 = vunpack.c.l.b16 %v354
      %v507 = vunpack.c.h.b16 %v354
      %v508 = vunpack.c.l.b16 %v355
      %v509 = vunpack.c.h.b16 %v355
      %v510 = vunpack.c.l.b16 %v356
      %v511 = vunpack.c.h.b16 %v356
      %v512 = vunpack.c.l.b16 %v357
      %v513 = vunpack.c.h.b16 %v357
      %v514 = vunpack.c.l.b16 %v358
      %v515 = vunpack.c.h.b16 %v358
      %v516 = vunpack.c.l.b16 %v359
      %v517 = vunpack.c.h.b16 %v359
      %v518 = vunpack.c.l.b16 %v360
      %v519 = vunpack.c.h.b16 %v360
      %v520 = vunpack.c.l.b16 %v361
      %v521 = vunpack.c.h.b16 %v361
      %v522 = vunpack.c.l.b16 %v362
      %v523 = vunpack.c.h.b16 %v362
      %v524 = vunpack.c.l.b16 %v363
      %v525 = vunpack.c.h.b16 %v363
      %v526 = vunpack.c.l.b16 %v364
      %v527 = vunpack.c.h.b16 %v364
      %v528 = vunpack.c.l.b16 %v365
      %v529 = vunpack.c.h.b16 %v365
      %v530 = vunpack.c.l.b16 %v366
      %v531 = vunpack.c.h.b16 %v366
      %v532 = vunpack.c.l.b16 %v367
      %v533 = vunpack.c.h.b16 %v367
      %v534 = vunpack.c.l.b16 %v368
      %v535 = vunpack.c.h.b16 %v368
      %v536 = vunpack.c.l.b16 %v369
      %v537 = vunpack.c.h.b16 %v369
      %v538 = vunpack.c.l.b16 %v370
      %v539 = vunpack.c.h.b16 %v370
      %v540 = vunpack.c.l.b16 %v371
      %v541 = vunpack.c.h.b16 %v371
      %v542 = vunpack.c.l.b16 %v372
      %v543 = vunpack.c.h.b16 %v372
      %v544 = vunpack.c.l.b16 %v373
      %v545 = vunpack.c.h.b16 %v373
      %v546 = vunpack.c.l.b16 %v374
      %v547 = vunpack.c.h.b16 %v374
      %v548 = vunpack.c.l.b16 %v375
      %v549 = vunpack.c.h.b16 %v375
      %v550 = vunpack.c.l.b16 %v376
      %v551 = vunpack.c.h.b16 %v376
      %v552 = vunpack.c.l.b16 %v377
      %v553 = vunpack.c.h.b16 %v377
      %v554 = vunpack.c.l.b16 %v378
      %v555 = vunpack.c.h.b16 %v378
      %v556 = vunpack.c.l.b16 %v379
      %v557 = vunpack.c.h.b16 %v379
      %v558 = vunpack.c.l.b16 %v380
      %v559 = vunpack.c.h.b16 %v380
      %v560 = vunpack.c.l.b16 %v381
      %v561 = vunpack.c.h.b16 %v381
      %v562 = vunpack.c.l.b16 %v382
      %v563 = vunpack.c.h.b16 %v382
      %v564 = vunpack.c.l.b16 %v383
      %v565 = vunpack.c.h.b16 %v383
      %v566 = vunpack.c.l.b16 %v384
      %v567 = vunpack.c.h.b16 %v384
      %v568 = vunpack.c.l.b16 %v385
      %v569 = vunpack.c.h.b16 %v385
      %v570 = vunpack.c.l.b16 %v386
      %v571 = vunpack.c.h.b16 %v386
      %v572 = vunpack.c.l.b16 %v387
      %v573 = vunpack.c.h.b16 %v387
      %v574 = vunpack.c.l.b16 %v388
      %v575 = vunpack.c.h.b16 %v388
      %v576 = vunpack.c.l.b16 %v389
      %v577 = vunpack.c.h.b16 %v389
      %v578 = vunpack.c.l.b16 %v390
      %v579 = vunpack.c.h.b16 %v390
      %v580 = vunpack.c.l.b16 %v391
      %v581 = vunpack.c.h.b16 %v391
      %v582 = vunpack.c.l.b16 %v392
      %v583 = vunpack.c.h.b16 %v392
      %v584 = vunpack.c.l.b16 %v393
      %v585 = vunpack.c.h.b16 %v393
      %v586 = vunpack.c.l.b16 %v394
      %v587 = vunpack.c.h.b16 %v394
      %v588 = vunpack.c.l.b16 %v395
      %v589 = vunpack.c.h.b16 %v395
      %v590 = vunpack.c.l.b16 %v396
      %v591 = vunpack.c.h.b16 %v396
      %v592 = vunpack.c.l.b16 %v397
      %v593 = vunpack.c.h.b16 %v397
      %v594 = vunpack.c.l.b16 %v398
      %v595 = vunpack.c.h.b16 %v398
      %v596 = vunpack.c.l.b16 %v399
      %v597 = vunpack.c.h.b16 %v399
      %v598 = vpack.c.b16 %v468, %v466
      %v599 = vpack.c.b16 %v469, %v467
      %v600 = vpack.c.b16 %v472, %v470
      %v601 = vpack.c.b16 %v473, %v471
      %v602 = vpack.c.b16 %v476, %v474
      %v603 = vpack.c.b16 %v477, %v475
      %v604 = vpack.c.b16 %v480, %v478
      %v605 = vpack.c.b16 %v481, %v479
      %v606 = vpack.c.b16 %v484, %v482
      %v607 = vpack.c.b16 %v485, %v483
      %v608 = vpack.c.b16 %v488, %v486
      %v609 = vpack.c.b16 %v489, %v487
      %v610 = vpack.c.b16 %v492, %v490
      %v611 = vpack.c.b16 %v493, %v491
      %v612 = vpack.c.b16 %v496, %v494
      %v613 = vpack.c.b16 %v497, %v495
      %v614 = vpack.c.b16 %v500, %v498
      %v615 = vpack.c.b16 %v501, %v499
      %v616 = vpack.c.b16 %v504, %v502
      %v617 = vpack.c.b16 %v505, %v503
      %v618 = vpack.c.b16 %v508, %v506
      %v619 = vpack.c.b16 %v509, %v507
      %v620 = vpack.c.b16 %v512, %v510
      %v621 = vpack.c.b16 %v513, %v511
      %v622 = vpack.c.b16 %v516, %v514
      %v623 = vpack.c.b16 %v517, %v515
      %v624 = vpack.c.b16 %v520, %v518
      %v625 = vpack.c.b16 %v521, %v519
      %v626 = vpack.c.b16 %v524, %v522
      %v627 = vpack.c.b16 %v525, %v523
      %v628 = vpack.c.b16 %v528, %v526
      %v629 = vpack.c.b16 %v529, %v527
      %v630 = vpack.c.b16 %v532, %v530
      %v631 = vpack.c.b16 %v533, %v531
      %v632 = vpack.c.b16 %v536, %v534
      %v633 = vpack.c.b16 %v537, %v535
      %v634 = vpack.c.b16 %v540, %v538
      %v635 = vpack.c.b16 %v541, %v539
      %v636 = vpack.c.b16 %v544, %v542
      %v637 = vpack.c.b16 %v545, %v543
      %v638 = vpack.c.b16 %v548, %v546
      %v639 = vpack.c.b16 %v549, %v547
      %v640 = vpack.c.b16 %v552, %v550
      %v641 = vpack.c.b16 %v553, %v551
      %v642 = vpack.c.b16 %v556, %v554
      %v643 = vpack.c.b16 %v557, %v555
      %v644 = vpack.c.b16 %v560, %v558
      %v645 = vpack.c.b16 %v561, %v559
      %v646 = vpack.c.b16 %v564, %v562
      %v647 = vpack.c.b16 %v565, %v563
      %v648 = vpack.c.b16 %v568, %v566
      %v649 = vpack.c.b16 %v569, %v567
      %v650 = vpack.c.b16 %v572, %v570
      %v651 = vpack.c.b16 %v573, %v571
      %v652 = vpack.c.b16 %v576, %v574
      %v653 = vpack.c.b16 %v577, %v575
      %v654 = vpack.c.b16 %v580, %v578
      %v655 = vpack.c.b16 %v581, %v579
      %v656 = vpack.c.b16 %v584, %v582
      %v657 = vpack.c.b16 %v585, %v583
      %v658 = vpack.c.b16 %v588, %v586
      %v659 = vpack.c.b16 %v589, %v587
      %v660 = vpack.c.b16 %v592, %v590
      %v661 = vpack.c.b16 %v593, %v591
      %v662 = vpack.c.b16 %v596, %v594
      %v663 = vpack.c.b16 %v597, %v595
      %vm697 = vcmask 392192
      %v699 = vsel %vm697, %v599, 0
      %v702 = vsel %vm697, %v601, 0
      %v705 = vsel %vm697, %v603, 0
      %v708 = vsel %vm697, %v605, 0
      %v711 = vsel %vm697, %v607, 0
      %v714 = vsel %vm697, %v609, 0
      %v717 = vsel %vm697, %v611, 0
      %v720 = vsel %vm697, %v613, 0
      %v723 = vsel %vm697, %v615, 0
      %v726 = vsel %vm697, %v617, 0
      %v729 = vsel %vm697, %v619, 0
      %v732 = vsel %vm697, %v621, 0
      %v735 = vsel %vm697, %v623, 0
      %v738 = vsel %vm697, %v625, 0
      %v741 = vsel %vm697, %v627, 0
      %v744 = vsel %vm697, %v629, 0
      %v747 = vsel %vm697, %v631, 0
      %v750 = vsel %vm697, %v633, 0
      %v753 = vsel %vm697, %v635, 0
      %v756 = vsel %vm697, %v637, 0
      %v759 = vsel %vm697, %v639, 0
      %v762 = vsel %vm697, %v641, 0
      %v765 = vsel %vm697, %v643, 0
      %v768 = vsel %vm697, %v645, 0
      %v771 = vsel %vm697, %v647, 0
      %v774 = vsel %vm697, %v649, 0
      %v777 = vsel %vm697, %v651, 0
      %v780 = vsel %vm697, %v653, 0
      %v783 = vsel %vm697, %v655, 0
      %v786 = vsel %vm697, %v657, 0
      %v789 = vsel %vm697, %v659, 0
      %v792 = vsel %vm697, %v661, 0
      %v795 = vsel %vm697, %v663, 0
      %797 = vmatprep.subr.bf16.mxu0 %v327
      %798 = vmatpush1.bf16.msra.mxu0 %v326
      %799 = vmatprep.subr.bf16.mxu0 %v325
      %800 = vmatpush1.bf16.msra.mxu0 %v324
      %801 = vmatprep.subr.bf16.mxu0 %v323
      %802 = vmatpush1.bf16.msra.mxu0 %v322
      %803 = vmatprep.subr.bf16.mxu0 %v321
      %804 = vmatpush1.bf16.msra.mxu0 %v320
      %805 = vmatprep.subr.bf16.mxu0 %v319
      %806 = vmatpush1.bf16.msra.mxu0 %v318
      %807 = vmatprep.subr.bf16.mxu0 %v317
      %808 = vmatpush1.bf16.msra.mxu0 %v316
      %809 = vmatprep.subr.bf16.mxu0 %v315
      %810 = vmatpush1.bf16.msra.mxu0 %v314
      %811 = vmatprep.subr.bf16.mxu0 %v313
      %812 = vmatpush1.bf16.msra.mxu0 %v312
      %813 = vmatprep.subr.bf16.mxu0 0
      %814 = vmatpush2.bf16.msra.mxu0 0
      %815 = vmatprep.subr.bf16.mxu0 0
      %816 = vmatpush2.bf16.msra.mxu0 0
      %817 = vmatprep.subr.bf16.mxu0 0
      %818 = vmatpush2.bf16.msra.mxu0 0
      %819 = vmatprep.subr.bf16.mxu0 0
      %820 = vmatpush2.bf16.msra.mxu0 0
      %821 = vmatprep.subr.bf16.mxu0 0
      %822 = vmatpush2.bf16.msra.mxu0 0
      %823 = vmatprep.subr.bf16.mxu0 %v333
      %824 = vmatpush2.bf16.msra.mxu0 %v332
      %825 = vmatprep.subr.bf16.mxu0 %v331
      %826 = vmatpush2.bf16.msra.mxu0 %v330
      %827 = vmatprep.subr.bf16.mxu0 %v329
      %828 = vmatpush2.bf16.msra.mxu0 %v328
      %829 = vmatprep.mubr.bf16.mxu0 %v699
      %830 = vmatmul.mubr.bf16.gmra.mxu0 %v598
      %v831 = vpop.f32.mrf.mxu0
      %v832 = vadd.f32 0.0, %v831
      %v833 = vpop.f32.mrf.mxu0
      %v834 = vadd.f32 0.0, %v833
      %v835 = vpop.f32.mrf.mxu0
      %v836 = vadd.f32 0.0, %v835
      %v837 = vpop.f32.mrf.mxu0
      %v838 = vadd.f32 0.0, %v837
      %839 = vmatprep.mubr.bf16.mxu0 %v702
      %840 = vmatmul.mubr.bf16.gmra.mxu0 %v600
      %v841 = vpop.f32.mrf.mxu0
      %v842 = vadd.f32 0.0, %v841
      %v843 = vpop.f32.mrf.mxu0
      %v844 = vadd.f32 0.0, %v843
      %v845 = vpop.f32.mrf.mxu0
      %v846 = vadd.f32 0.0, %v845
      %v847 = vpop.f32.mrf.mxu0
      %v848 = vadd.f32 0.0, %v847
      %849 = vmatprep.mubr.bf16.mxu0 %v705
      %850 = vmatmul.mubr.bf16.gmra.mxu0 %v602
      %v851 = vpop.f32.mrf.mxu0
      %v852 = vadd.f32 0.0, %v851
      %v853 = vpop.f32.mrf.mxu0
      %v854 = vadd.f32 0.0, %v853
      %v855 = vpop.f32.mrf.mxu0
      %v856 = vadd.f32 0.0, %v855
      %v857 = vpop.f32.mrf.mxu0
      %v858 = vadd.f32 0.0, %v857
      %859 = vmatprep.mubr.bf16.mxu0 %v708
      %860 = vmatmul.mubr.bf16.gmra.mxu0 %v604
      %v861 = vpop.f32.mrf.mxu0
      %v862 = vadd.f32 0.0, %v861
      %v863 = vpop.f32.mrf.mxu0
      %v864 = vadd.f32 0.0, %v863
      %v865 = vpop.f32.mrf.mxu0
      %v866 = vadd.f32 0.0, %v865
      %v867 = vpop.f32.mrf.mxu0
      %v868 = vadd.f32 0.0, %v867
      %869 = vmatprep.mubr.bf16.mxu0 %v711
      %870 = vmatmul.mubr.bf16.gmra.mxu0 %v606
      %v871 = vpop.f32.mrf.mxu0
      %v872 = vadd.f32 0.0, %v871
      %v873 = vpop.f32.mrf.mxu0
      %v874 = vadd.f32 0.0, %v873
      %v875 = vpop.f32.mrf.mxu0
      %v876 = vadd.f32 0.0, %v875
      %v877 = vpop.f32.mrf.mxu0
      %v878 = vadd.f32 0.0, %v877
      %879 = vmatprep.mubr.bf16.mxu0 %v714
      %880 = vmatmul.mubr.bf16.gmra.mxu0 %v608
      %v881 = vpop.f32.mrf.mxu0
      %v882 = vadd.f32 0.0, %v881
      %v883 = vpop.f32.mrf.mxu0
      %v884 = vadd.f32 0.0, %v883
      %v885 = vpop.f32.mrf.mxu0
      %v886 = vadd.f32 0.0, %v885
      %v887 = vpop.f32.mrf.mxu0
      %v888 = vadd.f32 0.0, %v887
      %889 = vmatprep.mubr.bf16.mxu0 %v717
      %890 = vmatmul.mubr.bf16.gmra.mxu0 %v610
      %v891 = vpop.f32.mrf.mxu0
      %v892 = vadd.f32 0.0, %v891
      %v893 = vpop.f32.mrf.mxu0
      %v894 = vadd.f32 0.0, %v893
      %v895 = vpop.f32.mrf.mxu0
      %v896 = vadd.f32 0.0, %v895
      %v897 = vpop.f32.mrf.mxu0
      %v898 = vadd.f32 0.0, %v897
      %899 = vmatprep.mubr.bf16.mxu0 %v720
      %900 = vmatmul.mubr.bf16.gmra.mxu0 %v612
      %v901 = vpop.f32.mrf.mxu0
      %v902 = vadd.f32 0.0, %v901
      %v903 = vpop.f32.mrf.mxu0
      %v904 = vadd.f32 0.0, %v903
      %v905 = vpop.f32.mrf.mxu0
      %v906 = vadd.f32 0.0, %v905
      %v907 = vpop.f32.mrf.mxu0
      %v908 = vadd.f32 0.0, %v907
      %909 = vmatprep.mubr.bf16.mxu0 %v723
      %910 = vmatmul.mubr.bf16.gmra.mxu0 %v614
      %v911 = vpop.f32.mrf.mxu0
      %v912 = vadd.f32 0.0, %v911
      %v913 = vpop.f32.mrf.mxu0
      %v914 = vadd.f32 0.0, %v913
      %v915 = vpop.f32.mrf.mxu0
      %v916 = vadd.f32 0.0, %v915
      %v917 = vpop.f32.mrf.mxu0
      %v918 = vadd.f32 0.0, %v917
      %919 = vmatprep.mubr.bf16.mxu0 %v726
      %920 = vmatmul.mubr.bf16.gmra.mxu0 %v616
      %v921 = vpop.f32.mrf.mxu0
      %v922 = vadd.f32 0.0, %v921
      %v923 = vpop.f32.mrf.mxu0
      %v924 = vadd.f32 0.0, %v923
      %v925 = vpop.f32.mrf.mxu0
      %v926 = vadd.f32 0.0, %v925
      %v927 = vpop.f32.mrf.mxu0
      %v928 = vadd.f32 0.0, %v927
      %929 = vmatprep.mubr.bf16.mxu0 %v729
      %930 = vmatmul.mubr.bf16.gmra.mxu0 %v618
      %v931 = vpop.f32.mrf.mxu0
      %v932 = vadd.f32 0.0, %v931
      %v933 = vpop.f32.mrf.mxu0
      %v934 = vadd.f32 0.0, %v933
      %v935 = vpop.f32.mrf.mxu0
      %v936 = vadd.f32 0.0, %v935
      %v937 = vpop.f32.mrf.mxu0
      %v938 = vadd.f32 0.0, %v937
      %939 = vmatprep.mubr.bf16.mxu0 %v732
      %940 = vmatmul.mubr.bf16.gmra.mxu0 %v620
      %v941 = vpop.f32.mrf.mxu0
      %v942 = vadd.f32 0.0, %v941
      %v943 = vpop.f32.mrf.mxu0
      %v944 = vadd.f32 0.0, %v943
      %v945 = vpop.f32.mrf.mxu0
      %v946 = vadd.f32 0.0, %v945
      %v947 = vpop.f32.mrf.mxu0
      %v948 = vadd.f32 0.0, %v947
      %949 = vmatprep.mubr.bf16.mxu0 %v735
      %950 = vmatmul.mubr.bf16.gmra.mxu0 %v622
      %v951 = vpop.f32.mrf.mxu0
      %v952 = vadd.f32 0.0, %v951
      %v953 = vpop.f32.mrf.mxu0
      %v954 = vadd.f32 0.0, %v953
      %v955 = vpop.f32.mrf.mxu0
      %v956 = vadd.f32 0.0, %v955
      %v957 = vpop.f32.mrf.mxu0
      %v958 = vadd.f32 0.0, %v957
      %959 = vmatprep.mubr.bf16.mxu0 %v738
      %960 = vmatmul.mubr.bf16.gmra.mxu0 %v624
      %v961 = vpop.f32.mrf.mxu0
      %v962 = vadd.f32 0.0, %v961
      %v963 = vpop.f32.mrf.mxu0
      %v964 = vadd.f32 0.0, %v963
      %v965 = vpop.f32.mrf.mxu0
      %v966 = vadd.f32 0.0, %v965
      %v967 = vpop.f32.mrf.mxu0
      %v968 = vadd.f32 0.0, %v967
      %969 = vmatprep.mubr.bf16.mxu0 %v741
      %970 = vmatmul.mubr.bf16.gmra.mxu0 %v626
      %v971 = vpop.f32.mrf.mxu0
      %v972 = vadd.f32 0.0, %v971
      %v973 = vpop.f32.mrf.mxu0
      %v974 = vadd.f32 0.0, %v973
      %v975 = vpop.f32.mrf.mxu0
      %v976 = vadd.f32 0.0, %v975
      %v977 = vpop.f32.mrf.mxu0
      %v978 = vadd.f32 0.0, %v977
      %979 = vmatprep.mubr.bf16.mxu0 %v744
      %980 = vmatmul.mubr.bf16.gmra.mxu0 %v628
      %v981 = vpop.f32.mrf.mxu0
      %v982 = vadd.f32 0.0, %v981
      %v983 = vpop.f32.mrf.mxu0
      %v984 = vadd.f32 0.0, %v983
      %v985 = vpop.f32.mrf.mxu0
      %v986 = vadd.f32 0.0, %v985
      %v987 = vpop.f32.mrf.mxu0
      %v988 = vadd.f32 0.0, %v987
      %989 = vmatprep.mubr.bf16.mxu0 %v747
      %990 = vmatmul.mubr.bf16.gmra.mxu0 %v630
      %v991 = vpop.f32.mrf.mxu0
      %v992 = vadd.f32 0.0, %v991
      %v993 = vpop.f32.mrf.mxu0
      %v994 = vadd.f32 0.0, %v993
      %v995 = vpop.f32.mrf.mxu0
      %v996 = vadd.f32 0.0, %v995
      %v997 = vpop.f32.mrf.mxu0
      %v998 = vadd.f32 0.0, %v997
      %999 = vmatprep.mubr.bf16.mxu0 %v750
      %1000 = vmatmul.mubr.bf16.gmra.mxu0 %v632
      %v1001 = vpop.f32.mrf.mxu0
      %v1002 = vadd.f32 0.0, %v1001
      %v1003 = vpop.f32.mrf.mxu0
      %v1004 = vadd.f32 0.0, %v1003
      %v1005 = vpop.f32.mrf.mxu0
      %v1006 = vadd.f32 0.0, %v1005
      %v1007 = vpop.f32.mrf.mxu0
      %v1008 = vadd.f32 0.0, %v1007
      %1009 = vmatprep.mubr.bf16.mxu0 %v753
      %1010 = vmatmul.mubr.bf16.gmra.mxu0 %v634
      %v1011 = vpop.f32.mrf.mxu0
      %v1012 = vadd.f32 0.0, %v1011
      %v1013 = vpop.f32.mrf.mxu0
      %v1014 = vadd.f32 0.0, %v1013
      %v1015 = vpop.f32.mrf.mxu0
      %v1016 = vadd.f32 0.0, %v1015
      %v1017 = vpop.f32.mrf.mxu0
      %v1018 = vadd.f32 0.0, %v1017
      %1019 = vmatprep.mubr.bf16.mxu0 %v756
      %1020 = vmatmul.mubr.bf16.gmra.mxu0 %v636
      %v1021 = vpop.f32.mrf.mxu0
      %v1022 = vadd.f32 0.0, %v1021
      %v1023 = vpop.f32.mrf.mxu0
      %v1024 = vadd.f32 0.0, %v1023
      %v1025 = vpop.f32.mrf.mxu0
      %v1026 = vadd.f32 0.0, %v1025
      %v1027 = vpop.f32.mrf.mxu0
      %v1028 = vadd.f32 0.0, %v1027
      %1029 = vmatprep.mubr.bf16.mxu0 %v759
      %1030 = vmatmul.mubr.bf16.gmra.mxu0 %v638
      %v1031 = vpop.f32.mrf.mxu0
      %v1032 = vadd.f32 0.0, %v1031
      %v1033 = vpop.f32.mrf.mxu0
      %v1034 = vadd.f32 0.0, %v1033
      %v1035 = vpop.f32.mrf.mxu0
      %v1036 = vadd.f32 0.0, %v1035
      %v1037 = vpop.f32.mrf.mxu0
      %v1038 = vadd.f32 0.0, %v1037
      %1039 = vmatprep.mubr.bf16.mxu0 %v762
      %1040 = vmatmul.mubr.bf16.gmra.mxu0 %v640
      %v1041 = vpop.f32.mrf.mxu0
      %v1042 = vadd.f32 0.0, %v1041
      %v1043 = vpop.f32.mrf.mxu0
      %v1044 = vadd.f32 0.0, %v1043
      %v1045 = vpop.f32.mrf.mxu0
      %v1046 = vadd.f32 0.0, %v1045
      %v1047 = vpop.f32.mrf.mxu0
      %v1048 = vadd.f32 0.0, %v1047
      %1049 = vmatprep.mubr.bf16.mxu0 %v765
      %1050 = vmatmul.mubr.bf16.gmra.mxu0 %v642
      %v1051 = vpop.f32.mrf.mxu0
      %v1052 = vadd.f32 0.0, %v1051
      %v1053 = vpop.f32.mrf.mxu0
      %v1054 = vadd.f32 0.0, %v1053
      %v1055 = vpop.f32.mrf.mxu0
      %v1056 = vadd.f32 0.0, %v1055
      %v1057 = vpop.f32.mrf.mxu0
      %v1058 = vadd.f32 0.0, %v1057
      %1059 = vmatprep.mubr.bf16.mxu0 %v768
      %1060 = vmatmul.mubr.bf16.gmra.mxu0 %v644
      %v1061 = vpop.f32.mrf.mxu0
      %v1062 = vadd.f32 0.0, %v1061
      %v1063 = vpop.f32.mrf.mxu0
      %v1064 = vadd.f32 0.0, %v1063
      %v1065 = vpop.f32.mrf.mxu0
      %v1066 = vadd.f32 0.0, %v1065
      %v1067 = vpop.f32.mrf.mxu0
      %v1068 = vadd.f32 0.0, %v1067
      %1069 = vmatprep.mubr.bf16.mxu0 %v771
      %1070 = vmatmul.mubr.bf16.gmra.mxu0 %v646
      %v1071 = vpop.f32.mrf.mxu0
      %v1072 = vadd.f32 0.0, %v1071
      %v1073 = vpop.f32.mrf.mxu0
      %v1074 = vadd.f32 0.0, %v1073
      %v1075 = vpop.f32.mrf.mxu0
      %v1076 = vadd.f32 0.0, %v1075
      %v1077 = vpop.f32.mrf.mxu0
      %v1078 = vadd.f32 0.0, %v1077
      %1079 = vmatprep.mubr.bf16.mxu0 %v774
      %1080 = vmatmul.mubr.bf16.gmra.mxu0 %v648
      %v1081 = vpop.f32.mrf.mxu0
      %v1082 = vadd.f32 0.0, %v1081
      %v1083 = vpop.f32.mrf.mxu0
      %v1084 = vadd.f32 0.0, %v1083
      %v1085 = vpop.f32.mrf.mxu0
      %v1086 = vadd.f32 0.0, %v1085
      %v1087 = vpop.f32.mrf.mxu0
      %v1088 = vadd.f32 0.0, %v1087
      %1089 = vmatprep.mubr.bf16.mxu0 %v777
      %1090 = vmatmul.mubr.bf16.gmra.mxu0 %v650
      %v1091 = vpop.f32.mrf.mxu0
      %v1092 = vadd.f32 0.0, %v1091
      %v1093 = vpop.f32.mrf.mxu0
      %v1094 = vadd.f32 0.0, %v1093
      %v1095 = vpop.f32.mrf.mxu0
      %v1096 = vadd.f32 0.0, %v1095
      %v1097 = vpop.f32.mrf.mxu0
      %v1098 = vadd.f32 0.0, %v1097
      %1099 = vmatprep.mubr.bf16.mxu0 %v780
      %1100 = vmatmul.mubr.bf16.gmra.mxu0 %v652
      %v1101 = vpop.f32.mrf.mxu0
      %v1102 = vadd.f32 0.0, %v1101
      %v1103 = vpop.f32.mrf.mxu0
      %v1104 = vadd.f32 0.0, %v1103
      %v1105 = vpop.f32.mrf.mxu0
      %v1106 = vadd.f32 0.0, %v1105
      %v1107 = vpop.f32.mrf.mxu0
      %v1108 = vadd.f32 0.0, %v1107
      %1109 = vmatprep.mubr.bf16.mxu0 %v783
      %1110 = vmatmul.mubr.bf16.gmra.mxu0 %v654
      %v1111 = vpop.f32.mrf.mxu0
      %v1112 = vadd.f32 0.0, %v1111
      %v1113 = vpop.f32.mrf.mxu0
      %v1114 = vadd.f32 0.0, %v1113
      %v1115 = vpop.f32.mrf.mxu0
      %v1116 = vadd.f32 0.0, %v1115
      %v1117 = vpop.f32.mrf.mxu0
      %v1118 = vadd.f32 0.0, %v1117
      %1119 = vmatprep.mubr.bf16.mxu0 %v786
      %1120 = vmatmul.mubr.bf16.gmra.mxu0 %v656
      %v1121 = vpop.f32.mrf.mxu0
      %v1122 = vadd.f32 0.0, %v1121
      %v1123 = vpop.f32.mrf.mxu0
      %v1124 = vadd.f32 0.0, %v1123
      %v1125 = vpop.f32.mrf.mxu0
      %v1126 = vadd.f32 0.0, %v1125
      %v1127 = vpop.f32.mrf.mxu0
      %v1128 = vadd.f32 0.0, %v1127
      %1129 = vmatprep.mubr.bf16.mxu0 %v789
      %1130 = vmatmul.mubr.bf16.gmra.mxu0 %v658
      %v1131 = vpop.f32.mrf.mxu0
      %v1132 = vadd.f32 0.0, %v1131
      %v1133 = vpop.f32.mrf.mxu0
      %v1134 = vadd.f32 0.0, %v1133
      %v1135 = vpop.f32.mrf.mxu0
      %v1136 = vadd.f32 0.0, %v1135
      %v1137 = vpop.f32.mrf.mxu0
      %v1138 = vadd.f32 0.0, %v1137
      %1139 = vmatprep.mubr.bf16.mxu0 %v792
      %1140 = vmatmul.mubr.bf16.gmra.mxu0 %v660
      %v1141 = vpop.f32.mrf.mxu0
      %v1142 = vadd.f32 0.0, %v1141
      %v1143 = vpop.f32.mrf.mxu0
      %v1144 = vadd.f32 0.0, %v1143
      %v1145 = vpop.f32.mrf.mxu0
      %v1146 = vadd.f32 0.0, %v1145
      %v1147 = vpop.f32.mrf.mxu0
      %v1148 = vadd.f32 0.0, %v1147
      %1149 = vmatprep.mubr.bf16.mxu0 %v795
      %1150 = vmatmul.mubr.bf16.gmra.mxu0 %v662
      %v1151 = vpop.f32.mrf.mxu0
      %v1152 = vadd.f32 0.0, %v1151
      %v1153 = vpop.f32.mrf.mxu0
      %v1154 = vadd.f32 0.0, %v1153
      %v1155 = vpop.f32.mrf.mxu0
      %v1156 = vadd.f32 0.0, %v1155
      %v1157 = vpop.f32.mrf.mxu0
      %v1158 = vadd.f32 0.0, %v1157
      %1159 = vdwg.mxu0
      %1160 = vst [vmem:[%s177] sm:$0xff] %v832
      %vm1161 = vcmask 556032
      %1162 = vst.msk [vmem:[%s177 + $0x8] sm:$0xff] %vm1161, %v834
      %1163 = vst [vmem:[%s177 + $0x10] sm:$0xff] %v836
      %1164 = vst.msk [vmem:[%s177 + $0x18] sm:$0xff] %vm1161, %v838
      %1165 = vst [vmem:[%s177 + $0x20] sm:$0xff] %v842
      %1166 = vst.msk [vmem:[%s177 + $0x28] sm:$0xff] %vm1161, %v844
      %1167 = vst [vmem:[%s177 + $0x30] sm:$0xff] %v846
      %1168 = vst.msk [vmem:[%s177 + $0x38] sm:$0xff] %vm1161, %v848
      %1169 = vst [vmem:[%s177 + $0x40] sm:$0xff] %v852
      %1170 = vst.msk [vmem:[%s177 + $0x48] sm:$0xff] %vm1161, %v854
      %1171 = vst [vmem:[%s177 + $0x50] sm:$0xff] %v856
      %1172 = vst.msk [vmem:[%s177 + $0x58] sm:$0xff] %vm1161, %v858
      %1173 = vst [vmem:[%s177 + $0x60] sm:$0xff] %v862
      %1174 = vst.msk [vmem:[%s177 + $0x68] sm:$0xff] %vm1161, %v864
      %1175 = vst [vmem:[%s177 + $0x70] sm:$0xff] %v866
      %1176 = vst.msk [vmem:[%s177 + $0x78] sm:$0xff] %vm1161, %v868
      %1177 = vst [vmem:[%s177 + $0x80] sm:$0xff] %v872
      %1178 = vst.msk [vmem:[%s177 + $0x88] sm:$0xff] %vm1161, %v874
      %1179 = vst [vmem:[%s177 + $0x90] sm:$0xff] %v876
      %1180 = vst.msk [vmem:[%s177 + $0x98] sm:$0xff] %vm1161, %v878
      %1181 = vst [vmem:[%s177 + $0xa0] sm:$0xff] %v882
      %1182 = vst.msk [vmem:[%s177 + $0xa8] sm:$0xff] %vm1161, %v884
      %1183 = vst [vmem:[%s177 + $0xb0] sm:$0xff] %v886
      %1184 = vst.msk [vmem:[%s177 + $0xb8] sm:$0xff] %vm1161, %v888
      %1185 = vst [vmem:[%s177 + $0xc0] sm:$0xff] %v892
      %1186 = vst.msk [vmem:[%s177 + $0xc8] sm:$0xff] %vm1161, %v894
      %1187 = vst [vmem:[%s177 + $0xd0] sm:$0xff] %v896
      %1188 = vst.msk [vmem:[%s177 + $0xd8] sm:$0xff] %vm1161, %v898
      %1189 = vst [vmem:[%s177 + $0xe0] sm:$0xff] %v902
      %1190 = vst.msk [vmem:[%s177 + $0xe8] sm:$0xff] %vm1161, %v904
      %1191 = vst [vmem:[%s177 + $0xf0] sm:$0xff] %v906
      %1192 = vst.msk [vmem:[%s177 + $0xf8] sm:$0xff] %vm1161, %v908
      %1193 = vst [vmem:[%s177 + $0x100] sm:$0xff] %v912
      %1194 = vst.msk [vmem:[%s177 + $0x108] sm:$0xff] %vm1161, %v914
      %1195 = vst [vmem:[%s177 + $0x110] sm:$0xff] %v916
      %1196 = vst.msk [vmem:[%s177 + $0x118] sm:$0xff] %vm1161, %v918
      %1197 = vst [vmem:[%s177 + $0x120] sm:$0xff] %v922
      %1198 = vst.msk [vmem:[%s177 + $0x128] sm:$0xff] %vm1161, %v924
      %1199 = vst [vmem:[%s177 + $0x130] sm:$0xff] %v926
      %1200 = vst.msk [vmem:[%s177 + $0x138] sm:$0xff] %vm1161, %v928
      %1201 = vst [vmem:[%s177 + $0x140] sm:$0xff] %v932
      %1202 = vst.msk [vmem:[%s177 + $0x148] sm:$0xff] %vm1161, %v934
      %1203 = vst [vmem:[%s177 + $0x150] sm:$0xff] %v936
      %1204 = vst.msk [vmem:[%s177 + $0x158] sm:$0xff] %vm1161, %v938
      %1205 = vst [vmem:[%s177 + $0x160] sm:$0xff] %v942
      %1206 = vst.msk [vmem:[%s177 + $0x168] sm:$0xff] %vm1161, %v944
      %1207 = vst [vmem:[%s177 + $0x170] sm:$0xff] %v946
      %1208 = vst.msk [vmem:[%s177 + $0x178] sm:$0xff] %vm1161, %v948
      %1209 = vst [vmem:[%s177 + $0x180] sm:$0xff] %v952
      %1210 = vst.msk [vmem:[%s177 + $0x188] sm:$0xff] %vm1161, %v954
      %1211 = vst [vmem:[%s177 + $0x190] sm:$0xff] %v956
      %1212 = vst.msk [vmem:[%s177 + $0x198] sm:$0xff] %vm1161, %v958
      %1213 = vst [vmem:[%s177 + $0x1a0] sm:$0xff] %v962
      %1214 = vst.msk [vmem:[%s177 + $0x1a8] sm:$0xff] %vm1161, %v964
      %1215 = vst [vmem:[%s177 + $0x1b0] sm:$0xff] %v966
      %1216 = vst.msk [vmem:[%s177 + $0x1b8] sm:$0xff] %vm1161, %v968
      %1217 = vst [vmem:[%s177 + $0x1c0] sm:$0xff] %v972
      %1218 = vst.msk [vmem:[%s177 + $0x1c8] sm:$0xff] %vm1161, %v974
      %1219 = vst [vmem:[%s177 + $0x1d0] sm:$0xff] %v976
      %1220 = vst.msk [vmem:[%s177 + $0x1d8] sm:$0xff] %vm1161, %v978
      %1221 = vst [vmem:[%s177 + $0x1e0] sm:$0xff] %v982
      %1222 = vst.msk [vmem:[%s177 + $0x1e8] sm:$0xff] %vm1161, %v984
      %1223 = vst [vmem:[%s177 + $0x1f0] sm:$0xff] %v986
      %1224 = vst.msk [vmem:[%s177 + $0x1f8] sm:$0xff] %vm1161, %v988
      %1225 = vst [vmem:[%s177 + $0x200] sm:$0xff] %v992
      %1226 = vst.msk [vmem:[%s177 + $0x208] sm:$0xff] %vm1161, %v994
      %1227 = vst [vmem:[%s177 + $0x210] sm:$0xff] %v996
      %1228 = vst.msk [vmem:[%s177 + $0x218] sm:$0xff] %vm1161, %v998
      %1229 = vst [vmem:[%s177 + $0x220] sm:$0xff] %v1002
      %1230 = vst.msk [vmem:[%s177 + $0x228] sm:$0xff] %vm1161, %v1004
      %1231 = vst [vmem:[%s177 + $0x230] sm:$0xff] %v1006
      %1232 = vst.msk [vmem:[%s177 + $0x238] sm:$0xff] %vm1161, %v1008
      %1233 = vst [vmem:[%s177 + $0x240] sm:$0xff] %v1012
      %1234 = vst.msk [vmem:[%s177 + $0x248] sm:$0xff] %vm1161, %v1014
      %1235 = vst [vmem:[%s177 + $0x250] sm:$0xff] %v1016
      %1236 = vst.msk [vmem:[%s177 + $0x258] sm:$0xff] %vm1161, %v1018
      %1237 = vst [vmem:[%s177 + $0x260] sm:$0xff] %v1022
      %1238 = vst.msk [vmem:[%s177 + $0x268] sm:$0xff] %vm1161, %v1024
      %1239 = vst [vmem:[%s177 + $0x270] sm:$0xff] %v1026
      %1240 = vst.msk [vmem:[%s177 + $0x278] sm:$0xff] %vm1161, %v1028
      %1241 = vst [vmem:[%s177 + $0x280] sm:$0xff] %v1032
      %1242 = vst.msk [vmem:[%s177 + $0x288] sm:$0xff] %vm1161, %v1034
      %1243 = vst [vmem:[%s177 + $0x290] sm:$0xff] %v1036
      %1244 = vst.msk [vmem:[%s177 + $0x298] sm:$0xff] %vm1161, %v1038
      %1245 = vst [vmem:[%s177 + $0x2a0] sm:$0xff] %v1042
      %1246 = vst.msk [vmem:[%s177 + $0x2a8] sm:$0xff] %vm1161, %v1044
      %1247 = vst [vmem:[%s177 + $0x2b0] sm:$0xff] %v1046
      %1248 = vst.msk [vmem:[%s177 + $0x2b8] sm:$0xff] %vm1161, %v1048
      %1249 = vst [vmem:[%s177 + $0x2c0] sm:$0xff] %v1052
      %1250 = vst.msk [vmem:[%s177 + $0x2c8] sm:$0xff] %vm1161, %v1054
      %1251 = vst [vmem:[%s177 + $0x2d0] sm:$0xff] %v1056
      %1252 = vst.msk [vmem:[%s177 + $0x2d8] sm:$0xff] %vm1161, %v1058
      %1253 = vst [vmem:[%s177 + $0x2e0] sm:$0xff] %v1062
      %1254 = vst.msk [vmem:[%s177 + $0x2e8] sm:$0xff] %vm1161, %v1064
      %1255 = vst [vmem:[%s177 + $0x2f0] sm:$0xff] %v1066
      %1256 = vst.msk [vmem:[%s177 + $0x2f8] sm:$0xff] %vm1161, %v1068
      %1257 = vst [vmem:[%s177 + $0x300] sm:$0xff] %v1072
      %1258 = vst.msk [vmem:[%s177 + $0x308] sm:$0xff] %vm1161, %v1074
      %1259 = vst [vmem:[%s177 + $0x310] sm:$0xff] %v1076
      %1260 = vst.msk [vmem:[%s177 + $0x318] sm:$0xff] %vm1161, %v1078
      %1261 = vst [vmem:[%s177 + $0x320] sm:$0xff] %v1082
      %1262 = vst.msk [vmem:[%s177 + $0x328] sm:$0xff] %vm1161, %v1084
      %1263 = vst [vmem:[%s177 + $0x330] sm:$0xff] %v1086
      %1264 = vst.msk [vmem:[%s177 + $0x338] sm:$0xff] %vm1161, %v1088
      %1265 = vst [vmem:[%s177 + $0x340] sm:$0xff] %v1092
      %1266 = vst.msk [vmem:[%s177 + $0x348] sm:$0xff] %vm1161, %v1094
      %1267 = vst [vmem:[%s177 + $0x350] sm:$0xff] %v1096
      %1268 = vst.msk [vmem:[%s177 + $0x358] sm:$0xff] %vm1161, %v1098
      %1269 = vst [vmem:[%s177 + $0x360] sm:$0xff] %v1102
      %1270 = vst.msk [vmem:[%s177 + $0x368] sm:$0xff] %vm1161, %v1104
      %1271 = vst [vmem:[%s177 + $0x370] sm:$0xff] %v1106
      %1272 = vst.msk [vmem:[%s177 + $0x378] sm:$0xff] %vm1161, %v1108
      %1273 = vst [vmem:[%s177 + $0x380] sm:$0xff] %v1112
      %1274 = vst.msk [vmem:[%s177 + $0x388] sm:$0xff] %vm1161, %v1114
      %1275 = vst [vmem:[%s177 + $0x390] sm:$0xff] %v1116
      %1276 = vst.msk [vmem:[%s177 + $0x398] sm:$0xff] %vm1161, %v1118
      %1277 = vst [vmem:[%s177 + $0x3a0] sm:$0xff] %v1122
      %1278 = vst.msk [vmem:[%s177 + $0x3a8] sm:$0xff] %vm1161, %v1124
      %1279 = vst [vmem:[%s177 + $0x3b0] sm:$0xff] %v1126
      %1280 = vst.msk [vmem:[%s177 + $0x3b8] sm:$0xff] %vm1161, %v1128
      %1281 = vst [vmem:[%s177 + $0x3c0] sm:$0xff] %v1132
      %1282 = vst.msk [vmem:[%s177 + $0x3c8] sm:$0xff] %vm1161, %v1134
      %1283 = vst [vmem:[%s177 + $0x3d0] sm:$0xff] %v1136
      %1284 = vst.msk [vmem:[%s177 + $0x3d8] sm:$0xff] %vm1161, %v1138
      %1285 = vst [vmem:[%s177 + $0x3e0] sm:$0xff] %v1142
      %1286 = vst.msk [vmem:[%s177 + $0x3e8] sm:$0xff] %vm1161, %v1144
      %1287 = vst [vmem:[%s177 + $0x3f0] sm:$0xff] %v1146
      %1288 = vst.msk [vmem:[%s177 + $0x3f8] sm:$0xff] %vm1161, %v1148
      %1289 = vst [vmem:[%s177 + $0x400] sm:$0xff] %v1152
      %1290 = vst.msk [vmem:[%s177 + $0x408] sm:$0xff] %vm1161, %v1154
      %1291 = vst [vmem:[%s177 + $0x410] sm:$0xff] %v1156
      %1292 = vst.msk [vmem:[%s177 + $0x418] sm:$0xff] %vm1161, %v1158
      %s1293 = smul.u32 66, %s14
      %p1294 = scmp.lt.s32.totalorder %s1293, 131
      %s1295 = scalar_select %p1294, %s1293, 131
      %s1296 = smul.addr %s1295, 2
      %s1297 = smul.addr %s1296, 8
      %s1298 = scalar_lea.vmem %s3, %s1297
      // Predicated region
      $region33: #{tpu_custom_call.1} parent=31 // pred_check
        %p1299 = pneg %p100
      $region34: #{tpu_custom_call.1} parent=31 // pred_check_branch
        %1301 = sbr.rel (%p1299) target = $region36
      $region35: #{tpu_custom_call.1} parent=31 // pred_region
        %s1302 = smul.u32 66, %s14
      $region36: #{tpu_custom_call.1} parent=31 // pred_fallthru
        _
    $region32: #{tpu_custom_call.1} parent=5 // pred_fallthru
      _
    %p1303 = scmp.le.s32.totalorder 2, %s9
    // Predicated region
    $region37: #{tpu_custom_call.1} parent=5 // pred_check
      %p1304 = pneg %p1303
    $region38: #{tpu_custom_call.1} parent=5 // pred_check_branch
      %1306 = sbr.rel (%p1304) target = $region40
    $region39: #{tpu_custom_call.1} parent=5 // pred_region
      %s1307 = ssub.s32 %s9, 2
      // Predicated region
      $region41: #{tpu_custom_call.1} parent=39 // pred_check
        %p1308 = pneg %p106
      $region42: #{tpu_custom_call.1} parent=39 // pred_check_branch
        %1310 = sbr.rel (%p1308) target = $region44
      $region43: #{tpu_custom_call.1} parent=39 // pred_region
        %s1311 = smul.u32 66, %s15
        %p1312 = scmp.lt.s32.totalorder %s1311, 131
        %s1313 = scalar_select %p1312, %s1311, 131
        %s1314 = smul.addr %s1313, 2
        %s1315 = smul.addr %s1314, 8
        %s1316 = scalar_lea.vmem %s3, %s1315
      $region44: #{tpu_custom_call.1} parent=39 // pred_fallthru
        _
    $region40: #{tpu_custom_call.1} parent=5 // pred_fallthru
      _
  $region6: #{tpu_custom_call.1} parent=0 // loop_footer
    %s13 = sadd.s32 1, %s9
  $region7: #{tpu_custom_call.1} parent=0 // loop_footer_branch
    %8 = sbr.rel target = $region3
  $region8: #{tpu_custom_call.1} parent=0 // loop_exit
    _

</llo_original>
